<compile_context>
chip_gen: v5e
topology: v5e:2x2
jax: 0.10.0
libtpu: 0.0.40
codegen_flags: <defaults>
</compile_context>

<pallas_src>
import functools

import jax
import jax.numpy as jnp
from jax import lax
from jax.experimental import pallas as pl
from jax.experimental.pallas import tpu as pltpu


def _vmem_limit_bytes():
    """Generation-conditional VMEM budget (~3/4 of physical capacity)."""
    try:
        cap = int(pltpu.get_tpu_info().vmem_capacity_bytes)
        return max(32 * 1024 * 1024, (cap * 3) // 4)
    except Exception:
        return 48 * 1024 * 1024  # safe default (fits v7x's 64 MiB)


def _round_up(x, m):
    return ((x + m - 1) // m) * m


def _pick_tile(dim, target, multiple):
    """Largest divisor of `dim` <= target that is a multiple of `multiple`;
    falls back to the full dim (block == full array dim is always legal)."""
    for t in range(min(dim, target), 0, -1):
        if dim % t == 0 and t % multiple == 0:
            return t
    return dim


# ------------------------------------------------------------------ matmul kernels

def _matmul_kernel(x_ref, w_ref, o_ref, acc_ref):
    # grid = (i over M tiles, j over Nout tiles, k over K tiles); k is last.
    @pl.when(pl.program_id(2) == 0)
    def _():
        acc_ref[...] = jnp.zeros_like(acc_ref)

    acc_ref[...] += jnp.dot(x_ref[...], w_ref[...],
                            preferred_element_type=jnp.float32)

    @pl.when(pl.program_id(2) == pl.num_programs(2) - 1)
    def _():
        o_ref[...] = acc_ref[...].astype(o_ref.dtype)


def _matmul_bias_kernel(x_ref, w_ref, b_ref, o_ref, acc_ref):
    @pl.when(pl.program_id(2) == 0)
    def _():
        acc_ref[...] = jnp.zeros_like(acc_ref)

    acc_ref[...] += jnp.dot(x_ref[...], w_ref[...],
                            preferred_element_type=jnp.float32)

    @pl.when(pl.program_id(2) == pl.num_programs(2) - 1)
    def _():
        o_ref[...] = (acc_ref[...] + b_ref[...]).astype(o_ref.dtype)


def _linear(x, w, b=None, *, tm=512, tn=1024, tk=512, vmem_limit=None):
    """Tiled, pipelined `x @ w (+ b)` with f32 accumulation.

    The M axis is padded to the tile so awkward row counts (e.g. B*197) still
    get proper pipelining instead of a full-dim fallback block.
    """
    if vmem_limit is None:
        vmem_limit = _vmem_limit_bytes()
    M, K = x.shape
    K2, Nout = w.shape
    assert K == K2
    tn = _pick_tile(Nout, tn, 128)
    tk = _pick_tile(K, tk, 128)
    tm = min(tm, _round_up(M, 8))
    Mp = _round_up(M, tm)
    if Mp != M:
        x = jnp.pad(x, ((0, Mp - M), (0, 0)))
    grid = (Mp // tm, Nout // tn, K // tk)

    in_specs = [
        pl.BlockSpec((tm, tk), lambda i, j, k: (i, k)),
        pl.BlockSpec((tk, tn), lambda i, j, k: (k, j)),
    ]
    args = [x, w]
    kernel = _matmul_kernel
    if b is not None:
        in_specs.append(pl.BlockSpec((1, tn), lambda i, j, k: (0, j)))
        args.append(b.reshape(1, Nout))
        kernel = _matmul_bias_kernel

    out = pl.pallas_call(
        kernel,
        out_shape=jax.ShapeDtypeStruct((Mp, Nout), x.dtype),
        grid=grid,
        in_specs=in_specs,
        out_specs=pl.BlockSpec((tm, tn), lambda i, j, k: (i, j)),
        scratch_shapes=[pltpu.VMEM((tm, tn), jnp.float32)],
        compiler_params=pltpu.CompilerParams(
            dimension_semantics=("parallel", "parallel", "arbitrary"),
            vmem_limit_bytes=vmem_limit,
        ),
    )(*args)
    return out[:M] if Mp != M else out


# ------------------------------------------------------------------ attention kernel

def _flash_attn_kernel(q_ref, k_ref, v_ref, o_ref, m_ref, l_ref, acc_ref,
                       *, num_heads, head_dim):
    # q_ref : (1, tq,  C)  query-column window of the packed qkv buffer
    # k_ref : (1, tkv, C)  key-column window
    # v_ref : (1, tkv, C)  value-column window
    # o_ref : (1, tq,  C)  lane-dense rows of the (B, N, C) output
    # m_ref, l_ref : (H, tq, 1) f32 online-softmax running max / denominator
    # acc_ref      : (tq, C)    f32 un-normalized output accumulator
    D = head_dim
    kv_i = pl.program_id(2)

    @pl.when(kv_i == 0)
    def _():
        m_ref[...] = jnp.full_like(m_ref, -jnp.inf)
        l_ref[...] = jnp.zeros_like(l_ref)
        acc_ref[...] = jnp.zeros_like(acc_ref)

    for h in range(num_heads):  # static unroll; per-head results land in refs
        # TODO(synk): with D=64 these are 64-lane windows (odd heads misaligned);
        # process head pairs per 128-lane slab to relieve XLU/copy pressure.
        q = q_ref[0, :, h * D:(h + 1) * D]            # (tq,  D) scale folded in w_qkv
        k = k_ref[0, :, h * D:(h + 1) * D]            # (tkv, D)
        v = v_ref[0, :, h * D:(h + 1) * D]            # (tkv, D)
        # Q.K^T via dot_general contracting the last axes (no k.T relayout).
        s = lax.dot_general(q, k, (((1,), (1,)), ((), ())),
                            preferred_element_type=jnp.float32)   # (tq, tkv) f32
        m_prev = m_ref[h]                                         # (tq, 1)
        m_new = jnp.maximum(m_prev, jnp.max(s, axis=-1, keepdims=True))
        alpha = jnp.exp(m_prev - m_new)                           # (tq, 1)
        p = jnp.exp(s - m_new)                                    # (tq, tkv)
        l_ref[h] = alpha * l_ref[h] + jnp.sum(p, axis=-1, keepdims=True)
        acc_ref[:, h * D:(h + 1) * D] = (
            alpha * acc_ref[:, h * D:(h + 1) * D]
            + jnp.dot(p.astype(v.dtype), v, preferred_element_type=jnp.float32))
        m_ref[h] = m_new

    @pl.when(kv_i == pl.num_programs(2) - 1)
    def _():
        # Normalize the (tq, D) accumulators, not the (tq, N) probability tile.
        for h in range(num_heads):
            inv = pl.reciprocal(l_ref[h], approx=True)            # EUP path
            acc_ref[:, h * D:(h + 1) * D] = acc_ref[:, h * D:(h + 1) * D] * inv
        o_ref[0] = acc_ref[...].astype(o_ref.dtype)               # one lane-dense store


# ------------------------------------------------------------------ wrapper

def attention_forward(x, w_qkv, w_proj, b_proj, num_heads):
    """Pallas forward of the ViT Attention module.  Feed bf16 x / weights for
    full MXU rate; accumulation and softmax statistics stay f32."""
    B, N, C = x.shape
    H = num_heads
    assert C % H == 0
    D = C // H
    scale = float(D) ** -0.5
    vmem_limit = _vmem_limit_bytes()

    # Fold the softmax scale into the q columns of w_qkv (one-time weight op,
    # removes the per-activation `q * scale` multiply in the kernel).
    w_qkv = jnp.concatenate([w_qkv[:, :C] * scale, w_qkv[:, C:]], axis=1)

    # ---- qkv projection: tiled matmul (qkv_bias=False -> no bias) ----
    qkv = _linear(x.reshape(B * N, C), w_qkv, vmem_limit=vmem_limit)
    qkv = qkv.reshape(B, N, 3 * C)                     # metadata-only reshape

    # ---- attention: flash-style, grid = (batch, query tiles, KV tiles) ----
    tq = _pick_tile(N, 256, 8)
    tkv = _pick_tile(N, 512, 8)
    # TODO(synk): for N with awkward factors (e.g. 197) this falls back to a
    # single full-N tile; pad N and mask padded keys to keep tiles bounded.

    if C % 128 == 0:
        # q/k/v as separate C-wide column windows of the packed qkv buffer:
        # only the needed columns are DMA'd, KV VMEM residency drops by 1/3.
        q_arr, k_arr, v_arr = qkv, qkv, qkv
        q_spec = pl.BlockSpec((1, tq, C), lambda b, qi, kv: (b, qi, 0))
        k_spec = pl.BlockSpec((1, tkv, C), lambda b, qi, kv: (b, kv, 1))
        v_spec = pl.BlockSpec((1, tkv, C), lambda b, qi, kv: (b, kv, 2))
    else:
        # Lane-misaligned C: split once in XLA (one extra activation pass).
        q_arr = qkv[:, :, 0:C]
        k_arr = qkv[:, :, C:2 * C]
        v_arr = qkv[:, :, 2 * C:3 * C]
        q_spec = pl.BlockSpec((1, tq, C), lambda b, qi, kv: (b, qi, 0))
        k_spec = pl.BlockSpec((1, tkv, C), lambda b, qi, kv: (b, kv, 0))
        v_spec = pl.BlockSpec((1, tkv, C), lambda b, qi, kv: (b, kv, 0))

    attn_out = pl.pallas_call(
        functools.partial(_flash_attn_kernel, num_heads=H, head_dim=D),
        out_shape=jax.ShapeDtypeStruct((B, N, C), x.dtype),
        grid=(B, N // tq, N // tkv),
        in_specs=[q_spec, k_spec, v_spec],
        out_specs=pl.BlockSpec((1, tq, C), lambda b, qi, kv: (b, qi, 0)),
        scratch_shapes=[
            pltpu.VMEM((H, tq, 1), jnp.float32),   # running max m
            pltpu.VMEM((H, tq, 1), jnp.float32),   # running denominator l
            pltpu.VMEM((tq, C), jnp.float32),      # un-normalized output acc
        ],
        compiler_params=pltpu.CompilerParams(
            dimension_semantics=("parallel", "parallel", "arbitrary"),
            vmem_limit_bytes=vmem_limit,
        ),
    )(q_arr, k_arr, v_arr)

    # ---- output projection: tiled matmul + bias ----
    # TODO(synk): fuse this projection as an epilogue of the attention kernel
    # to avoid the attn_out HBM round trip (most visible on v5e/v6e).
    out = _linear(attn_out.reshape(B * N, C), w_proj, b_proj,
                  vmem_limit=vmem_limit)
    return out.reshape(B, N, C)


# ------------------------------------------------------------------ reference

def attention_reference(x, w_qkv, w_proj, b_proj, num_heads):
    B, N, C = x.shape
    H = num_heads
    D = C // H
    scale = float(D) ** -0.5
    qkv = (x.reshape(B * N, C) @ w_qkv).reshape(B, N, 3, H, D)
    qkv = qkv.transpose(2, 0, 3, 1, 4)
    q, k, v = qkv[0], qkv[1], qkv[2]
    attn = jnp.einsum("bhnd,bhmd->bhnm", q, k) * scale
    attn = jax.nn.softmax(attn, axis=-1)
    y = jnp.einsum("bhnm,bhmd->bhnd", attn, v)
    y = y.transpose(0, 2, 1, 3).reshape(B * N, C)
    return (y @ w_proj + b_proj).reshape(B, N, C)


# ------------------------------------------------------------------ main

if __name__ == "__main__":
    B, N, C = 2, 8, 128          # small shapes; C multiple of 128 exercises the
    num_heads = 8                # split-qkv column-window path (head_dim = 16)

    key = jax.random.PRNGKey(0)
    kx, kq, kp, kb = jax.random.split(key, 4)
    x = jax.random.normal(kx, (B, N, C), dtype=jnp.float32)
    # synthetic deterministic parameters (qkv_bias=False per module default)
    w_qkv = jax.random.normal(kq, (C, 3 * C), dtype=jnp.float32) * 0.05
    w_proj = jax.random.normal(kp, (C, C), dtype=jnp.float32) * 0.05
    b_proj = jax.random.normal(kb, (C,), dtype=jnp.float32) * 0.05

    # bf16 operands (per perf review): the MXU peak is bf16-only; accumulation
    # inside the kernels stays f32 via preferred_element_type.
    xb = x.astype(jnp.bfloat16)
    wq = w_qkv.astype(jnp.bfloat16)
    wp = w_proj.astype(jnp.bfloat16)
    bp = b_proj.astype(jnp.bfloat16)

    out = attention_forward(xb, wq, wp, bp, num_heads)
    out = jax.block_until_ready(out)

    # Reference in f32 on the *same* bf16-quantized operands so the comparison
    # isolates kernel error (bf16 intermediate casts + EUP approx reciprocal).
    ref = attention_reference(xb.astype(jnp.float32), wq.astype(jnp.float32),
                              wp.astype(jnp.float32), bp.astype(jnp.float32),
                              num_heads)
    assert out.shape == (B, N, C)
    err = float(jnp.max(jnp.abs(out.astype(jnp.float32) - ref)))
    assert err < 2e-2, f"max err {err}"

    print("KERNEL_OK")
</pallas_src>

<mosaic_0001>
module attributes {stable_mosaic.version = 11 : i64} {
  func.func @_matmul_kernel(%arg0: i32, %arg1: i32, %arg2: i32, %arg3: memref<16x128xbf16, #tpu.memory_space<vmem>>, %arg4: memref<128x384xbf16, #tpu.memory_space<vmem>>, %arg5: memref<16x384xbf16, #tpu.memory_space<vmem>>, %arg6: memref<16x384xf32, #tpu.memory_space<vmem>>) attributes {dimension_semantics = [#tpu.dimension_semantics<parallel>, #tpu.dimension_semantics<parallel>, #tpu.dimension_semantics<arbitrary>], iteration_bounds = array<i64: 1, 1, 1>, scalar_prefetch = 0 : i64, scratch_operands = 1 : i64, tpu.core_type = #tpu.core_type<tc>, window_params = [{transform_indices = @transform_0, window_bounds = array<i64: 16, 128>}, {transform_indices = @transform_1, window_bounds = array<i64: 128, 384>}, {transform_indices = @transform_2, window_bounds = array<i64: 16, 384>}]} {
    %c0_i32 = arith.constant 0 : i32
    %0 = arith.cmpi eq, %arg2, %c0_i32 : i32
    %1 = arith.extui %0 : i1 to i32
    %c0_i32_0 = arith.constant 0 : i32
    %2 = arith.cmpi ne, %1, %c0_i32_0 : i32
    scf.if %2 {
      %cst_10 = arith.constant 0.000000e+00 : f32
      %12 = vector.broadcast %cst_10 : f32 to vector<16x384xf32>
      %c0_11 = arith.constant 0 : index
      %c0_12 = arith.constant 0 : index
      %13 = vector.load %arg6[%c0_11, %c0_12] : memref<16x384xf32, #tpu.memory_space<vmem>>, vector<16x384xf32>
      tpu.vector_store %arg6[%c0_11, %c0_12], %12 {strides = array<i32>} : memref<16x384xf32, #tpu.memory_space<vmem>>, vector<16x384xf32>,
    } else {
    }
    %c0 = arith.constant 0 : index
    %c0_1 = arith.constant 0 : index
    %3 = vector.load %arg6[%c0, %c0_1] : memref<16x384xf32, #tpu.memory_space<vmem>>, vector<16x384xf32>
    %c0_2 = arith.constant 0 : index
    %c0_3 = arith.constant 0 : index
    %4 = vector.load %arg3[%c0_2, %c0_3] : memref<16x128xbf16, #tpu.memory_space<vmem>>, vector<16x128xbf16>
    %c0_4 = arith.constant 0 : index
    %c0_5 = arith.constant 0 : index
    %5 = vector.load %arg4[%c0_4, %c0_5] : memref<128x384xbf16, #tpu.memory_space<vmem>>, vector<128x384xbf16>
    %cst = arith.constant dense<0.000000e+00> : vector<16x384xf32>
    %6 = tpu.matmul %4, %5, %cst {dimension_numbers = #tpu.dot_dimension_numbers<[1], [0], [0], [1], [0, 0, 1, 1], [], []>} : vector<16x128xbf16>, vector<128x384xbf16>, vector<16x384xf32> -> vector<16x384xf32>
    %7 = arith.addf %3, %6 : vector<16x384xf32>
    %c0_6 = arith.constant 0 : index
    %c0_7 = arith.constant 0 : index
    %8 = vector.load %arg6[%c0_6, %c0_7] : memref<16x384xf32, #tpu.memory_space<vmem>>, vector<16x384xf32>
    tpu.vector_store %arg6[%c0_6, %c0_7], %7 {strides = array<i32>} : memref<16x384xf32, #tpu.memory_space<vmem>>, vector<16x384xf32>,
    %c0_i32_8 = arith.constant 0 : i32
    %9 = arith.cmpi eq, %arg2, %c0_i32_8 : i32
    %10 = arith.extui %9 : i1 to i32
    %c0_i32_9 = arith.constant 0 : i32
    %11 = arith.cmpi ne, %10, %c0_i32_9 : i32
    scf.if %11 {
      %c0_10 = arith.constant 0 : index
      %c0_11 = arith.constant 0 : index
      %12 = vector.load %arg6[%c0_10, %c0_11] : memref<16x384xf32, #tpu.memory_space<vmem>>, vector<16x384xf32>
      %13 = arith.truncf %12 : vector<16x384xf32> to vector<16x384xbf16>
      %c0_12 = arith.constant 0 : index
      %c0_13 = arith.constant 0 : index
      %14 = vector.load %arg5[%c0_12, %c0_13] : memref<16x384xbf16, #tpu.memory_space<vmem>>, vector<16x384xbf16>
      tpu.vector_store %arg5[%c0_12, %c0_13], %13 {strides = array<i32>} : memref<16x384xbf16, #tpu.memory_space<vmem>>, vector<16x384xbf16>,
    } else {
    }
    return
  }
  func.func @transform_0(%arg0: i32, %arg1: i32, %arg2: i32) -> (i32, i32) {
    %c0_i32 = arith.constant 0 : i32
    return %arg0, %arg2 : i32, i32
  }
  func.func @transform_1(%arg0: i32, %arg1: i32, %arg2: i32) -> (i32, i32) {
    %c0_i32 = arith.constant 0 : i32
    return %arg2, %arg1 : i32, i32
  }
  func.func @transform_2(%arg0: i32, %arg1: i32, %arg2: i32) -> (i32, i32) {
    %c0_i32 = arith.constant 0 : i32
    return %arg0, %arg1 : i32, i32
  }
}

</mosaic_0001>

<llo_original>
// kernel: tpu_custom_call.1
$region0: #{tpu_custom_call.1}
  #allocation0 [shape = 'u32[]', space=smem, size = 0x4, offset = 0x4, fixed_abs, tag = 'smem constant byte address 0x4 - core index']
  #allocation1 [shape = 'u32[72,128]{1,0:T(1,128)}', space=vmem, size = 0x9000, scoped, tag = 'internal scratch']
  #allocation2 [shape = 'f32[16,384]{1,0:T(8,128)}', space=vmem, size = 0x6000, scoped, tag = 'scratch operand']
  %s0 = inlined_call_operand.hbm [shape: bf16[16,128], index: 0, kind: input, shape index: {}]
  %s1 = inlined_call_operand.hbm [shape: bf16[128,384], index: 1, kind: input, shape index: {}]
  %s2 = inlined_call_operand.hbm [shape: bf16[16,384], index: 2, kind: output, shape index: {}]
  %s3 = sld [smem:[#allocation0]]
  $region34: #{tpu_custom_call.1} parent=0
    _
  %s5 = ssub.s32 1, %s3
  %s6 = scalar_select 0, %s5, %s3
  $region1: #{tpu_custom_call.1} parent=0
    #allocation3 [shape = 'u8[4096]{0}', space=vmem, size = 0x1000, scoped, tag = 'input window, operand 0, single buffered']
    #allocation4 [shape = 's32[1]{0}', space=sflag, size = 0x4, scoped, tag = 'scoped memory for tpu_custom_call.1']
    #allocation5 [shape = 's32[1]{0}', space=sflag, size = 0x4, scoped, tag = 'scoped memory for tpu_custom_call.1']
    #allocation6 [shape = 'u8[98304]{0}', space=vmem, size = 0x18000, scoped, tag = 'input window, operand 1, single buffered']
    #allocation7 [shape = 's32[1]{0}', space=sflag, size = 0x4, scoped, tag = 'scoped memory for tpu_custom_call.1']
    #allocation8 [shape = 'u8[12288]{0}', space=vmem, size = 0x3000, scoped, tag = 'output window, operand 0, single buffered']
    %7 = vsyncpa [#allocation4], 0
    %8 = vsyncpa [#allocation7], 0
    %9 = vsyncpa [#allocation5], 0
    // Predicated region
    $region2: #{tpu_custom_call.1} parent=1 // pred_check
      _
    $region3: #{tpu_custom_call.1} parent=1 // pred_check_branch
      %11 = sbr.rel (0) target = $region5
    $region4: #{tpu_custom_call.1} parent=1 // pred_region
      %13 = vsyncadd [#allocation4], 0
      %s14 = sshll.u32 %s0, 4
      %s15 = int_to_ptr.hbm [resolvable:$true] %s14
      %s16 = sshll.u32 [#allocation3], 4
      %s17 = int_to_ptr.vmem [resolvable:$true] %s16
      %22 = dma.hbm_to_vmem [thread:$0]  %s15, 128, %s17, [#allocation4], 64, 64, 4
    $region5: #{tpu_custom_call.1} parent=1 // pred_fallthru
      _
    // Predicated region
    $region6: #{tpu_custom_call.1} parent=1 // pred_check
      _
    $region7: #{tpu_custom_call.1} parent=1 // pred_check_branch
      %24 = sbr.rel (0) target = $region9
    $region8: #{tpu_custom_call.1} parent=1 // pred_region
      %26 = vsyncadd [#allocation7], 0
      %s27 = sshll.u32 %s1, 4
      %s28 = int_to_ptr.hbm [resolvable:$true] %s27
      %s29 = sshll.u32 [#allocation6], 4
      %s30 = int_to_ptr.vmem [resolvable:$true] %s29
      %35 = dma.hbm_to_vmem [thread:$0]  %s28, 3072, %s30, [#allocation7], 192, 192, 12
    $region9: #{tpu_custom_call.1} parent=1 // pred_fallthru
      _
    // Predicated region
    $region10: #{tpu_custom_call.1} parent=1 // pred_check
      _
    $region11: #{tpu_custom_call.1} parent=1 // pred_check_branch
      %37 = sbr.rel (0) target = $region13
    $region12: #{tpu_custom_call.1} parent=1 // pred_region
      %39 = dma.done [#allocation4], 128
    $region13: #{tpu_custom_call.1} parent=1 // pred_fallthru
      _
    // Predicated region
    $region14: #{tpu_custom_call.1} parent=1 // pred_check
      _
    $region15: #{tpu_custom_call.1} parent=1 // pred_check_branch
      %41 = sbr.rel (0) target = $region17
    $region16: #{tpu_custom_call.1} parent=1 // pred_region
      %43 = dma.done [#allocation7], 3072
    $region17: #{tpu_custom_call.1} parent=1 // pred_fallthru
      _
    %p44 = scmp.eq.s32.totalorder 0, 0
    // Predicated region
    $region18: #{tpu_custom_call.1} parent=1 // pred_check
      %p45 = pneg %p44
    $region19: #{tpu_custom_call.1} parent=1 // pred_check_branch
      %47 = sbr.rel (%p45) target = $region21
    $region20: #{tpu_custom_call.1} parent=1 // pred_region
      %48 = vst [vmem:[#allocation2] sm:$0xff] 0.0
      %49 = vst [vmem:[#allocation2 + $0x8] sm:$0xff] 0.0
      %50 = vst [vmem:[#allocation2 + $0x10] sm:$0xff] 0.0
      %51 = vst [vmem:[#allocation2 + $0x18] sm:$0xff] 0.0
      %52 = vst [vmem:[#allocation2 + $0x20] sm:$0xff] 0.0
      %53 = vst [vmem:[#allocation2 + $0x28] sm:$0xff] 0.0
    $region21: #{tpu_custom_call.1} parent=1 // pred_fallthru
      _
    %v54 = vld [vmem:[#allocation2] sm:$0xff]
    %v55 = vld [vmem:[#allocation2 + $0x8] sm:$0xff]
    %v56 = vld [vmem:[#allocation2 + $0x10] sm:$0xff]
    %v57 = vld [vmem:[#allocation2 + $0x18] sm:$0xff]
    %v58 = vld [vmem:[#allocation2 + $0x20] sm:$0xff]
    %v59 = vld [vmem:[#allocation2 + $0x28] sm:$0xff]
    %v60 = vld [vmem:[#allocation3] sm:$0xf]
    %v61 = vld [vmem:[#allocation3 + $0x4] sm:$0xf]
    %v62 = vld [vmem:[#allocation6] sm:$0xff]
    %v63 = vld [vmem:[#allocation6 + $0x8] sm:$0xf]
    %v64 = vld [vmem:[#allocation6 + $0xc] sm:$0xff]
    %v65 = vld [vmem:[#allocation6 + $0x14] sm:$0xf]
    %v66 = vld [vmem:[#allocation6 + $0x18] sm:$0xff]
    %v67 = vld [vmem:[#allocation6 + $0x20] sm:$0xf]
    %v68 = vld [vmem:[#allocation6 + $0x24] sm:$0xff]
    %v69 = vld [vmem:[#allocation6 + $0x2c] sm:$0xf]
    %v70 = vld [vmem:[#allocation6 + $0x30] sm:$0xff]
    %v71 = vld [vmem:[#allocation6 + $0x38] sm:$0xf]
    %v72 = vld [vmem:[#allocation6 + $0x3c] sm:$0xff]
    %v73 = vld [vmem:[#allocation6 + $0x44] sm:$0xf]
    %v74 = vld [vmem:[#allocation6 + $0x48] sm:$0xff]
    %v75 = vld [vmem:[#allocation6 + $0x50] sm:$0xf]
    %v76 = vld [vmem:[#allocation6 + $0x54] sm:$0xff]
    %v77 = vld [vmem:[#allocation6 + $0x5c] sm:$0xf]
    %v78 = vld [vmem:[#allocation6 + $0x60] sm:$0xff]
    %v79 = vld [vmem:[#allocation6 + $0x68] sm:$0xf]
    %v80 = vld [vmem:[#allocation6 + $0x6c] sm:$0xff]
    %v81 = vld [vmem:[#allocation6 + $0x74] sm:$0xf]
    %v82 = vld [vmem:[#allocation6 + $0x78] sm:$0xff]
    %v83 = vld [vmem:[#allocation6 + $0x80] sm:$0xf]
    %v84 = vld [vmem:[#allocation6 + $0x84] sm:$0xff]
    %v85 = vld [vmem:[#allocation6 + $0x8c] sm:$0xf]
    %v86 = vld [vmem:[#allocation6 + $0x90] sm:$0xff]
    %v87 = vld [vmem:[#allocation6 + $0x98] sm:$0xf]
    %v88 = vld [vmem:[#allocation6 + $0x9c] sm:$0xff]
    %v89 = vld [vmem:[#allocation6 + $0xa4] sm:$0xf]
    %v90 = vld [vmem:[#allocation6 + $0xa8] sm:$0xff]
    %v91 = vld [vmem:[#allocation6 + $0xb0] sm:$0xf]
    %v92 = vld [vmem:[#allocation6 + $0xb4] sm:$0xff]
    %v93 = vld [vmem:[#allocation6 + $0xbc] sm:$0xf]
    %v96 = vunpack.c.l.b16 %v60
    %v97 = vunpack.c.l.b16 %v61
    %v98 = vpack.c.b16 %v97, %v96
    %v132 = vunpack.c.l.b16 %v62
    %v133 = vunpack.c.h.b16 %v62
    %v134 = vunpack.c.l.b16 %v63
    %v135 = vunpack.c.l.b16 %v64
    %v136 = vunpack.c.h.b16 %v64
    %v137 = vunpack.c.l.b16 %v65
    %v138 = vunpack.c.l.b16 %v66
    %v139 = vunpack.c.h.b16 %v66
    %v140 = vunpack.c.l.b16 %v67
    %v141 = vunpack.c.l.b16 %v68
    %v142 = vunpack.c.h.b16 %v68
    %v143 = vunpack.c.l.b16 %v69
    %v144 = vunpack.c.l.b16 %v70
    %v145 = vunpack.c.h.b16 %v70
    %v146 = vunpack.c.l.b16 %v71
    %v147 = vunpack.c.l.b16 %v72
    %v148 = vunpack.c.h.b16 %v72
    %v149 = vunpack.c.l.b16 %v73
    %v150 = vunpack.c.l.b16 %v74
    %v151 = vunpack.c.h.b16 %v74
    %v152 = vunpack.c.l.b16 %v75
    %v153 = vunpack.c.l.b16 %v76
    %v154 = vunpack.c.h.b16 %v76
    %v155 = vunpack.c.l.b16 %v77
    %v156 = vunpack.c.l.b16 %v78
    %v157 = vunpack.c.h.b16 %v78
    %v158 = vunpack.c.l.b16 %v79
    %v159 = vunpack.c.l.b16 %v80
    %v160 = vunpack.c.h.b16 %v80
    %v161 = vunpack.c.l.b16 %v81
    %v162 = vunpack.c.l.b16 %v82
    %v163 = vunpack.c.h.b16 %v82
    %v164 = vunpack.c.l.b16 %v83
    %v165 = vunpack.c.l.b16 %v84
    %v166 = vunpack.c.h.b16 %v84
    %v167 = vunpack.c.l.b16 %v85
    %v168 = vunpack.c.l.b16 %v86
    %v169 = vunpack.c.h.b16 %v86
    %v170 = vunpack.c.l.b16 %v87
    %v171 = vunpack.c.l.b16 %v88
    %v172 = vunpack.c.h.b16 %v88
    %v173 = vunpack.c.l.b16 %v89
    %v174 = vunpack.c.l.b16 %v90
    %v175 = vunpack.c.h.b16 %v90
    %v176 = vunpack.c.l.b16 %v91
    %v177 = vunpack.c.l.b16 %v92
    %v178 = vunpack.c.h.b16 %v92
    %v179 = vunpack.c.l.b16 %v93
    %v180 = vpack.c.b16 %v135, %v132
    %v181 = vpack.c.b16 %v136, %v133
    %v182 = vpack.c.b16 %v137, %v134
    %v183 = vpack.c.b16 %v141, %v138
    %v184 = vpack.c.b16 %v142, %v139
    %v185 = vpack.c.b16 %v143, %v140
    %v186 = vpack.c.b16 %v147, %v144
    %v187 = vpack.c.b16 %v148, %v145
    %v188 = vpack.c.b16 %v149, %v146
    %v189 = vpack.c.b16 %v153, %v150
    %v190 = vpack.c.b16 %v154, %v151
    %v191 = vpack.c.b16 %v155, %v152
    %v192 = vpack.c.b16 %v159, %v156
    %v193 = vpack.c.b16 %v160, %v157
    %v194 = vpack.c.b16 %v161, %v158
    %v195 = vpack.c.b16 %v165, %v162
    %v196 = vpack.c.b16 %v166, %v163
    %v197 = vpack.c.b16 %v167, %v164
    %v198 = vpack.c.b16 %v171, %v168
    %v199 = vpack.c.b16 %v172, %v169
    %v200 = vpack.c.b16 %v173, %v170
    %v201 = vpack.c.b16 %v177, %v174
    %v202 = vpack.c.b16 %v178, %v175
    %v203 = vpack.c.b16 %v179, %v176
    %228 = vmatpush.bf16.msra.mxu0 %v201
    %229 = vmatpush.bf16.msra.mxu0 %v198
    %230 = vmatpush.bf16.msra.mxu0 %v195
    %231 = vmatpush.bf16.msra.mxu0 %v192
    %232 = vmatpush.bf16.msra.mxu0 %v189
    %233 = vmatpush.bf16.msra.mxu0 %v186
    %234 = vmatpush.bf16.msra.mxu0 %v183
    %235 = vmatpush.bf16.msra.mxu0 %v180
    %236 = vmatmul.bf16.gmra.mxu0 %v98
    %v237 = vpop.f32.mrf.mxu0
    %v238 = vadd.f32 0.0, %v237
    %v239 = vpop.f32.mrf.mxu0
    %v240 = vadd.f32 0.0, %v239
    %241 = vdwg.mxu0
    %242 = vmatpush.bf16.msra.mxu0 %v202
    %243 = vmatpush.bf16.msra.mxu0 %v199
    %244 = vmatpush.bf16.msra.mxu0 %v196
    %245 = vmatpush.bf16.msra.mxu0 %v193
    %246 = vmatpush.bf16.msra.mxu0 %v190
    %247 = vmatpush.bf16.msra.mxu0 %v187
    %248 = vmatpush.bf16.msra.mxu0 %v184
    %249 = vmatpush.bf16.msra.mxu0 %v181
    %250 = vmatmul.bf16.gmra.mxu0 %v98
    %v251 = vpop.f32.mrf.mxu0
    %v252 = vadd.f32 0.0, %v251
    %v253 = vpop.f32.mrf.mxu0
    %v254 = vadd.f32 0.0, %v253
    %255 = vdwg.mxu0
    %256 = vmatpush.bf16.msra.mxu0 %v203
    %257 = vmatpush.bf16.msra.mxu0 %v200
    %258 = vmatpush.bf16.msra.mxu0 %v197
    %259 = vmatpush.bf16.msra.mxu0 %v194
    %260 = vmatpush.bf16.msra.mxu0 %v191
    %261 = vmatpush.bf16.msra.mxu0 %v188
    %262 = vmatpush.bf16.msra.mxu0 %v185
    %263 = vmatpush.bf16.msra.mxu0 %v182
    %264 = vmatmul.bf16.gmra.mxu0 %v98
    %v265 = vpop.f32.mrf.mxu0
    %v266 = vadd.f32 0.0, %v265
    %v267 = vpop.f32.mrf.mxu0
    %v268 = vadd.f32 0.0, %v267
    %269 = vdwg.mxu0
    %v270 = vadd.f32 %v54, %v238
    %v271 = vadd.f32 %v55, %v252
    %v272 = vadd.f32 %v56, %v266
    %v273 = vadd.f32 %v57, %v240
    %v274 = vadd.f32 %v58, %v254
    %v275 = vadd.f32 %v59, %v268
    %276 = vst [vmem:[#allocation2] sm:$0xff] %v270
    %277 = vst [vmem:[#allocation2 + $0x8] sm:$0xff] %v271
    %278 = vst [vmem:[#allocation2 + $0x10] sm:$0xff] %v272
    %279 = vst [vmem:[#allocation2 + $0x18] sm:$0xff] %v273
    %280 = vst [vmem:[#allocation2 + $0x20] sm:$0xff] %v274
    %281 = vst [vmem:[#allocation2 + $0x28] sm:$0xff] %v275
    // Predicated region
    $region22: #{tpu_custom_call.1} parent=1 // pred_check
      %p282 = pneg %p44
    $region23: #{tpu_custom_call.1} parent=1 // pred_check_branch
      %284 = sbr.rel (%p282) target = $region25
    $region24: #{tpu_custom_call.1} parent=1 // pred_region
      %v285 = vld [vmem:[#allocation2] sm:$0xff]
      %v286 = vld [vmem:[#allocation2 + $0x8] sm:$0xff]
      %v287 = vld [vmem:[#allocation2 + $0x10] sm:$0xff]
      %v288 = vld [vmem:[#allocation2 + $0x18] sm:$0xff]
      %v289 = vld [vmem:[#allocation2 + $0x20] sm:$0xff]
      %v290 = vld [vmem:[#allocation2 + $0x28] sm:$0xff]
      %v291 = vpack.c.bf16 %v286, %v285
      %v292 = vpack.c.bf16 %v287, %v287
      %v293 = vpack.c.bf16 %v289, %v288
      %v294 = vpack.c.bf16 %v290, %v290
      %295 = vst [vmem:[#allocation8] sm:$0xff] %v291
      %296 = vst [vmem:[#allocation8 + $0x8] sm:$0xf] %v292
      %297 = vst [vmem:[#allocation8 + $0xc] sm:$0xff] %v293
      %298 = vst [vmem:[#allocation8 + $0x14] sm:$0xf] %v294
    $region25: #{tpu_custom_call.1} parent=1 // pred_fallthru
      _
    // Predicated region
    $region26: #{tpu_custom_call.1} parent=1 // pred_check
      _
    $region27: #{tpu_custom_call.1} parent=1 // pred_check_branch
      %300 = sbr.rel (0) target = $region29
    $region28: #{tpu_custom_call.1} parent=1 // pred_region
      %302 = vsyncadd [#allocation5], 0
      %s303 = sshll.u32 [#allocation8], 4
      %s304 = int_to_ptr.vmem [resolvable:$true] %s303
      %s305 = sshll.u32 %s2, 4
      %s306 = int_to_ptr.hbm [resolvable:$true] %s305
      %311 = dma.vmem_to_hbm [thread:$0]  %s304, 384, %s306, [#allocation5], 192, 192, 12
    $region29: #{tpu_custom_call.1} parent=1 // pred_fallthru
      _
    // Predicated region
    $region30: #{tpu_custom_call.1} parent=1 // pred_check
      _
    $region31: #{tpu_custom_call.1} parent=1 // pred_check_branch
      %313 = sbr.rel (0) target = $region33
    $region32: #{tpu_custom_call.1} parent=1 // pred_region
      %315 = dma.done [#allocation5], 384
    $region33: #{tpu_custom_call.1} parent=1 // pred_fallthru
      _
    %316 = vsyncpa [#allocation4], 1
    %317 = vsyncpa [#allocation7], 1
    %318 = vsyncpa [#allocation5], 1

</llo_original>
